<compile_context>
chip_gen: v5e
topology: v5e:2x2
jax: 0.10.0
libtpu: 0.0.40
codegen_flags: <defaults>
</compile_context>

<pallas_src>
import functools

import numpy as np
import jax
import jax.numpy as jnp
from jax.experimental import pallas as pl
from jax.experimental.pallas import tpu as pltpu


def _triu_vectorize_kernel(x_ref, o_ref, *, n: int, g: int):
    """x_ref: (TB, g*n*n) row-major packed matrices; o_ref: (TB, g*m) triu vecs.

    The upper-triangular lanes of each packed matrix are gathered with static
    ref slices and assembled into one full-width value, then written with a
    single lane-dense store (no masked narrow stores).
    """
    nn_ = n * n
    pieces = []
    for j in range(g):            # unrolled at trace time; g, n are static
        base = j * nn_
        for i in range(n):        # row i contributes flat lanes [i*n+i, i*n+n)
            pieces.append(x_ref[:, base + i * n + i: base + i * n + n])
    o_ref[...] = jnp.concatenate(pieces, axis=1)


def spd_vectorize(x: jax.Array) -> jax.Array:
    """Forward of SPDVectorize: (B, C, n, n) -> (B, C, n*(n+1)//2)."""
    B, C, n, n2 = x.shape
    assert n == n2, "expected square SPD matrices"
    m = n * (n + 1) // 2
    BC = B * C
    nn_ = n * n
    itemsize = x.dtype.itemsize

    # --- Lane packing: put g matrices per lane row when n*n < 128 lanes. ----
    g_max = max(1, 128 // nn_)
    g = 1
    for cand in range(min(g_max, BC), 0, -1):
        if BC % cand == 0:
            g = cand
            break
    rows = BC // g
    row_in = g * nn_          # input lanes per row
    row_out = g * m           # output lanes per row

    xf = x.reshape(rows, row_in)

    # --- Batch-block (TB) selection: dtype-aware, VMEM-aware. ---------------
    sub = max(8, 32 // itemsize)                  # 8 f32, 16 bf16, 32 int8/fp8
    target_bytes = 8 * 1024 * 1024                # double-buffered in+out goal
    tb = target_bytes // (2 * (row_in + row_out) * itemsize)
    tb = max(sub, (tb // sub) * sub)              # round down to sublane mult
    rows_padded = -(-rows // sub) * sub
    tb = min(tb, rows_padded)                     # never larger than the data
    # Force >= 2 grid steps when possible so v7x's two TensorCores both work.
    if pl.cdiv(rows, tb) == 1 and rows > sub:
        tb = -(-pl.cdiv(rows, 2) // sub) * sub
    grid = (pl.cdiv(rows, tb),)

    # --- VMEM limit derived from the actual double-buffered footprint. ------
    footprint = 2 * tb * (row_in + row_out) * itemsize
    vmem_limit = int(min(32 * 1024 * 1024,
                         max(4 * 1024 * 1024, 2 * footprint + (1 << 20))))

    bytes_accessed = (BC * nn_ + BC * m) * itemsize

    out_flat = pl.pallas_call(
        functools.partial(_triu_vectorize_kernel, n=n, g=g),
        out_shape=jax.ShapeDtypeStruct((rows, row_out), x.dtype),
        grid=grid,
        in_specs=[pl.BlockSpec((tb, row_in), lambda i: (i, 0))],
        out_specs=pl.BlockSpec((tb, row_out), lambda i: (i, 0)),
        compiler_params=pltpu.CompilerParams(
            dimension_semantics=("parallel",),
            vmem_limit_bytes=vmem_limit,
        ),
        cost_estimate=pl.CostEstimate(
            flops=0, transcendentals=0, bytes_accessed=bytes_accessed
        ),
    )(xf)

    # Undo the lane packing: (rows, g*m) -> (BC, m) -> (B, C, m).
    return out_flat.reshape(BC, m).reshape(B, C, m)


if __name__ == "__main__":
    key = jax.random.PRNGKey(0)
    B, C, n = 2, 4, 16
    x = jax.random.normal(key, (B, C, n, n), dtype=jnp.float32)
    # Symmetrize so inputs look like SPDNet covariance features (the gather
    # itself is layout-only and does not require symmetry).
    x = 0.5 * (x + jnp.swapaxes(x, -1, -2))

    out = jax.block_until_ready(spd_vectorize(x))

    # NumPy reference replicating the PyTorch forward exactly.
    iu, ju = np.triu_indices(n)
    ref = np.asarray(x)[:, :, iu, ju]

    assert out.shape == (B, C, n * (n + 1) // 2)
    np.testing.assert_array_equal(np.asarray(out), ref)

    # Also check a small-n case that exercises the lane-packing path (n*n<128).
    B2, C2, n2s = 2, 8, 7
    x2 = jax.random.normal(jax.random.PRNGKey(1), (B2, C2, n2s, n2s),
                           dtype=jnp.float32)
    x2 = 0.5 * (x2 + jnp.swapaxes(x2, -1, -2))
    out2 = jax.block_until_ready(spd_vectorize(x2))
    iu2, ju2 = np.triu_indices(n2s)
    np.testing.assert_array_equal(np.asarray(out2), np.asarray(x2)[:, :, iu2, ju2])

    print("KERNEL_OK")
</pallas_src>

<mosaic_0001>
module attributes {stable_mosaic.version = 11 : i64} {
  func.func @_triu_vectorize_kernel(%arg0: i32, %arg1: memref<8x256xf32, #tpu.memory_space<vmem>>, %arg2: memref<8x136xf32, #tpu.memory_space<vmem>>) attributes {dimension_semantics = [#tpu.dimension_semantics<parallel>], iteration_bounds = array<i64: 1>, scalar_prefetch = 0 : i64, scratch_operands = 0 : i64, tpu.core_type = #tpu.core_type<tc>, window_params = [{transform_indices = @transform_0, window_bounds = array<i64: 8, 256>}, {transform_indices = @transform_1, window_bounds = array<i64: 8, 136>}]} {
    %c0 = arith.constant 0 : index
    %c0_0 = arith.constant 0 : index
    %0 = vector.load %arg1[%c0, %c0_0] : memref<8x256xf32, #tpu.memory_space<vmem>>, vector<8x16xf32>
    %c0_1 = arith.constant 0 : index
    %c17 = arith.constant 17 : index
    %1 = vector.load %arg1[%c0_1, %c17] : memref<8x256xf32, #tpu.memory_space<vmem>>, vector<8x15xf32>
    %c0_2 = arith.constant 0 : index
    %c34 = arith.constant 34 : index
    %2 = vector.load %arg1[%c0_2, %c34] : memref<8x256xf32, #tpu.memory_space<vmem>>, vector<8x14xf32>
    %c0_3 = arith.constant 0 : index
    %c51 = arith.constant 51 : index
    %3 = vector.load %arg1[%c0_3, %c51] : memref<8x256xf32, #tpu.memory_space<vmem>>, vector<8x13xf32>
    %c0_4 = arith.constant 0 : index
    %c68 = arith.constant 68 : index
    %4 = vector.load %arg1[%c0_4, %c68] : memref<8x256xf32, #tpu.memory_space<vmem>>, vector<8x12xf32>
    %c0_5 = arith.constant 0 : index
    %c85 = arith.constant 85 : index
    %5 = vector.load %arg1[%c0_5, %c85] : memref<8x256xf32, #tpu.memory_space<vmem>>, vector<8x11xf32>
    %c0_6 = arith.constant 0 : index
    %c102 = arith.constant 102 : index
    %6 = vector.load %arg1[%c0_6, %c102] : memref<8x256xf32, #tpu.memory_space<vmem>>, vector<8x10xf32>
    %c0_7 = arith.constant 0 : index
    %c119 = arith.constant 119 : index
    %7 = vector.load %arg1[%c0_7, %c119] : memref<8x256xf32, #tpu.memory_space<vmem>>, vector<8x9xf32>
    %c0_8 = arith.constant 0 : index
    %c136 = arith.constant 136 : index
    %8 = vector.load %arg1[%c0_8, %c136] : memref<8x256xf32, #tpu.memory_space<vmem>>, vector<8x8xf32>
    %c0_9 = arith.constant 0 : index
    %c153 = arith.constant 153 : index
    %9 = vector.load %arg1[%c0_9, %c153] : memref<8x256xf32, #tpu.memory_space<vmem>>, vector<8x7xf32>
    %c0_10 = arith.constant 0 : index
    %c170 = arith.constant 170 : index
    %10 = vector.load %arg1[%c0_10, %c170] : memref<8x256xf32, #tpu.memory_space<vmem>>, vector<8x6xf32>
    %c0_11 = arith.constant 0 : index
    %c187 = arith.constant 187 : index
    %11 = vector.load %arg1[%c0_11, %c187] : memref<8x256xf32, #tpu.memory_space<vmem>>, vector<8x5xf32>
    %c0_12 = arith.constant 0 : index
    %c204 = arith.constant 204 : index
    %12 = vector.load %arg1[%c0_12, %c204] : memref<8x256xf32, #tpu.memory_space<vmem>>, vector<8x4xf32>
    %c0_13 = arith.constant 0 : index
    %c221 = arith.constant 221 : index
    %13 = vector.load %arg1[%c0_13, %c221] : memref<8x256xf32, #tpu.memory_space<vmem>>, vector<8x3xf32>
    %c0_14 = arith.constant 0 : index
    %c238 = arith.constant 238 : index
    %14 = vector.load %arg1[%c0_14, %c238] : memref<8x256xf32, #tpu.memory_space<vmem>>, vector<8x2xf32>
    %c0_15 = arith.constant 0 : index
    %c255 = arith.constant 255 : index
    %15 = vector.load %arg1[%c0_15, %c255] : memref<8x256xf32, #tpu.memory_space<vmem>>, vector<8x1xf32>
    %16 = tpu.concatenate %0, %1, %2, %3, %4, %5, %6, %7, %8, %9, %10, %11, %12, %13, %14, %15 in 1 : vector<8x16xf32>, vector<8x15xf32>, vector<8x14xf32>, vector<8x13xf32>, vector<8x12xf32>, vector<8x11xf32>, vector<8x10xf32>, vector<8x9xf32>, vector<8x8xf32>, vector<8x7xf32>, vector<8x6xf32>, vector<8x5xf32>, vector<8x4xf32>, vector<8x3xf32>, vector<8x2xf32>, vector<8x1xf32> -> vector<8x136xf32>
    %c0_16 = arith.constant 0 : index
    %c0_17 = arith.constant 0 : index
    %17 = vector.load %arg2[%c0_16, %c0_17] : memref<8x136xf32, #tpu.memory_space<vmem>>, vector<8x136xf32>
    tpu.vector_store %arg2[%c0_16, %c0_17], %16 {strides = array<i32>} : memref<8x136xf32, #tpu.memory_space<vmem>>, vector<8x136xf32>,
    return
  }
  func.func @transform_0(%arg0: i32) -> (i32, i32) {
    %c0_i32 = arith.constant 0 : i32
    %c0_i32_0 = arith.constant 0 : i32
    return %arg0, %c0_i32 : i32, i32
  }
  func.func @transform_1(%arg0: i32) -> (i32, i32) {
    %c0_i32 = arith.constant 0 : i32
    %c0_i32_0 = arith.constant 0 : i32
    return %arg0, %c0_i32 : i32, i32
  }
}

</mosaic_0001>

<llo_original>
// kernel: tpu_custom_call.1
$region0: #{tpu_custom_call.1}
  #allocation0 [shape = 'u32[]', space=smem, size = 0x4, offset = 0x4, fixed_abs, tag = 'smem constant byte address 0x4 - core index']
  #allocation1 [shape = 'u32[72,128]{1,0:T(1,128)}', space=vmem, size = 0x9000, scoped, tag = 'internal scratch']
  %s0 = inlined_call_operand.hbm [shape: f32[8,256], index: 0, kind: input, shape index: {}]
  %s1 = inlined_call_operand.hbm [shape: f32[8,136], index: 1, kind: output, shape index: {}]
  %s2 = sld [smem:[#allocation0]]
  $region18: #{tpu_custom_call.1} parent=0
    _
  %s4 = ssub.s32 1, %s2
  %s5 = scalar_select 0, %s4, %s2
  $region1: #{tpu_custom_call.1} parent=0
    #allocation2 [shape = 'u8[8192]{0}', space=vmem, size = 0x2000, scoped, tag = 'input window, operand 0, single buffered']
    #allocation3 [shape = 's32[1]{0}', space=sflag, size = 0x4, scoped, tag = 'scoped memory for tpu_custom_call.1']
    #allocation4 [shape = 's32[1]{0}', space=sflag, size = 0x4, scoped, tag = 'scoped memory for tpu_custom_call.1']
    #allocation5 [shape = 'u8[8192]{0}', space=vmem, size = 0x2000, scoped, tag = 'output window, operand 0, single buffered']
    %6 = vsyncpa [#allocation3], 0
    %7 = vsyncpa [#allocation4], 0
    // Predicated region
    $region2: #{tpu_custom_call.1} parent=1 // pred_check
      _
    $region3: #{tpu_custom_call.1} parent=1 // pred_check_branch
      %9 = sbr.rel (0) target = $region5
    $region4: #{tpu_custom_call.1} parent=1 // pred_region
      %11 = vsyncadd [#allocation3], 0
      %s13 = sshll.u32 %s0, 4
      %s14 = int_to_ptr.hbm [resolvable:$true] %s13
      %s15 = sshll.u32 [#allocation2], 4
      %s16 = int_to_ptr.vmem [resolvable:$true] %s15
      %18 = dma.hbm_to_vmem [thread:$0]  %s14, 256, %s16, [#allocation3]
    $region5: #{tpu_custom_call.1} parent=1 // pred_fallthru
      _
    // Predicated region
    $region6: #{tpu_custom_call.1} parent=1 // pred_check
      _
    $region7: #{tpu_custom_call.1} parent=1 // pred_check_branch
      %20 = sbr.rel (0) target = $region9
    $region8: #{tpu_custom_call.1} parent=1 // pred_region
      %22 = dma.done [#allocation3], 256
    $region9: #{tpu_custom_call.1} parent=1 // pred_fallthru
      _
    %v23 = vld [vmem:[#allocation2] sm:$0xff]
    %v24 = vld [vmem:[#allocation2 + $0x8] sm:$0xff]
    %26 = vrot.lane.b32.xlu0 %v23, 127
    %v27 = vpop.permute.xlu0 %26
    %29 = vrot.lane.b32.xlu0 %v23, 125
    %v30 = vpop.permute.xlu0 %29
    %32 = vrot.lane.b32.xlu0 %v23, 122
    %v33 = vpop.permute.xlu0 %32
    %35 = vrot.lane.b32.xlu0 %v23, 118
    %v36 = vpop.permute.xlu0 %35
    %38 = vrot.lane.b32.xlu0 %v23, 113
    %v39 = vpop.permute.xlu0 %38
    %41 = vrot.lane.b32.xlu0 %v23, 107
    %v42 = vpop.permute.xlu0 %41
    %44 = vrot.lane.b32.xlu0 %v23, 100
    %v45 = vpop.permute.xlu0 %44
    %48 = vrot.lane.b32.xlu0 %v24, 92
    %v49 = vpop.permute.xlu0 %48
    %51 = vrot.lane.b32.xlu0 %v24, 83
    %v52 = vpop.permute.xlu0 %51
    %54 = vrot.lane.b32.xlu0 %v24, 73
    %v55 = vpop.permute.xlu0 %54
    %57 = vrot.lane.b32.xlu0 %v24, 62
    %v58 = vpop.permute.xlu0 %57
    %60 = vrot.lane.b32.xlu0 %v24, 50
    %v61 = vpop.permute.xlu0 %60
    %63 = vrot.lane.b32.xlu0 %v24, 37
    %v64 = vpop.permute.xlu0 %63
    %66 = vrot.lane.b32.xlu0 %v24, 23
    %v67 = vpop.permute.xlu0 %66
    %69 = vrot.lane.b32.xlu0 %v24, 8
    %v70 = vpop.permute.xlu0 %69
    %vm72 = vcmask 130048
    %v73 = vsel %vm72, %v23, %v27
    %vm74 = vcmask 252928
    %v75 = vsel %vm74, %v73, %v30
    %vm76 = vcmask 367616
    %v77 = vsel %vm76, %v75, %v33
    %vm78 = vcmask 474112
    %v79 = vsel %vm78, %v77, %v36
    %vm80 = vcmask 572416
    %v81 = vsel %vm80, %v79, %v39
    %vm82 = vcmask 662528
    %v83 = vsel %vm82, %v81, %v42
    %vm84 = vcmask 744448
    %v85 = vsel %vm84, %v83, %v45
    %vm86 = vcmask 818176
    %v87 = vsel %vm86, %v85, %v49
    %vm88 = vcmask 883712
    %v89 = vsel %vm88, %v87, %v52
    %vm90 = vcmask 941056
    %v91 = vsel %vm90, %v89, %v55
    %vm92 = vcmask 990208
    %v93 = vsel %vm92, %v91, %v58
    %vm94 = vcmask 1031168
    %v95 = vsel %vm94, %v93, %v61
    %vm96 = vcmask 15360
    %v97 = vsel %vm96, %v61, %v64
    %vm98 = vcmask 39936
    %v99 = vsel %vm98, %v97, %v67
    %vm100 = vcmask 56320
    %v101 = vsel %vm100, %v99, %v70
    %102 = vst [vmem:[#allocation5] sm:$0xff] %v95
    %vm103 = vcmask 64512
    %104 = vst.msk [vmem:[#allocation5 + $0x8] sm:$0xff] %vm103, %v101
    // Predicated region
    $region10: #{tpu_custom_call.1} parent=1 // pred_check
      _
    $region11: #{tpu_custom_call.1} parent=1 // pred_check_branch
      %106 = sbr.rel (0) target = $region13
    $region12: #{tpu_custom_call.1} parent=1 // pred_region
      %108 = vsyncadd [#allocation4], 0
      %s110 = sshll.u32 [#allocation5], 4
      %s111 = int_to_ptr.vmem [resolvable:$true] %s110
      %s112 = sshll.u32 %s1, 4
      %s113 = int_to_ptr.hbm [resolvable:$true] %s112
      %115 = dma.vmem_to_hbm [thread:$0]  %s111, 256, %s113, [#allocation4]
    $region13: #{tpu_custom_call.1} parent=1 // pred_fallthru
      _
    // Predicated region
    $region14: #{tpu_custom_call.1} parent=1 // pred_check
      _
    $region15: #{tpu_custom_call.1} parent=1 // pred_check_branch
      %117 = sbr.rel (0) target = $region17
    $region16: #{tpu_custom_call.1} parent=1 // pred_region
      %119 = dma.done [#allocation4], 256
    $region17: #{tpu_custom_call.1} parent=1 // pred_fallthru
      _
    %120 = vsyncpa [#allocation3], 1
    %121 = vsyncpa [#allocation4], 1

</llo_original>
